<compile_context>
chip_gen: v6e
topology: v6e:2x2x1
jax: 0.10.0
libtpu: 0.0.40
codegen_flags: <defaults>
</compile_context>

<pallas_src>
import functools

import jax
import jax.numpy as jnp
from jax.experimental import pallas as pl
from jax.experimental.pallas import tpu as pltpu

KL_COEFFICIENT = 0.04
GROUP_SIZE = 4          # stands in for hp.GRPO_GROUP_SIZE
_SCORER_PAD = 128       # scorer column padded out to one full lane tile


def fuse_grpo_heads(scorer_w, scorer_b, ref_w, ref_b, *, param_dtype=None):
    """Fuse the frozen scorer (H,1) and reference (H,V) heads ONCE (model init).

    Returns a lane-dense (H, V+128) weight (scorer column in the padded block,
    remaining pad columns exactly zero) and a (1, V+128) f32 bias row, so the
    kernel needs a single MXU pass and the per-call wrapper does no HBM-side
    zeros+scatter epilogue.  Pass param_dtype=jnp.bfloat16 at production scale.
    """
    H, V = ref_w.shape
    assert V % 128 == 0, "pad the vocab to a multiple of 128 lanes before fusing"
    param_dtype = param_dtype or ref_w.dtype
    w = jnp.zeros((H, V + _SCORER_PAD), dtype=param_dtype)
    w = w.at[:, :V].set(ref_w.astype(param_dtype))
    w = w.at[:, V:V + 1].set(scorer_w.astype(param_dtype))
    b = jnp.zeros((1, V + _SCORER_PAD), dtype=jnp.float32)
    b = b.at[0, :V].set(ref_b.astype(jnp.float32))
    b = b.at[0, V].set(scorer_b.reshape(()).astype(jnp.float32))
    return w, b


def _grpo_kernel(emb_ref, plog_ref, w_ref, b_ref, sel_ref, selt_ref, out_ref, *,
                 group_size: int, vocab_size: int):
    G = group_size
    V = vocab_size

    emb = emb_ref[...]                               # (tB, H) native dtype -> MXU
    plog = plog_ref[...].astype(jnp.float32)         # (tB, V) softmax math in f32

    # ---- fused scorer + reference heads: one lane-dense MXU pass ---------------
    fused = jnp.dot(emb, w_ref[...], preferred_element_type=jnp.float32) + b_ref[...]
    ref_logits = fused[:, :V]                        # (tB, V)  lane-aligned slice
    # Pad columns past V are exactly zero, so a lane-sum of the last 128-lane
    # block (idle XLU slot) replaces a masked single-lane extract.
    rewards = jnp.sum(fused[:, V:], axis=-1, keepdims=True)           # (tB, 1)

    # ---- group-relative advantages: two tiny selector matmuls ------------------
    sel = sel_ref[...]                               # (n_groups, tB)  resident
    sel_t = selt_ref[...]                            # (tB, n_groups)  resident
    stacked = jnp.concatenate([rewards, rewards * rewards], axis=-1)  # (tB, 2)
    stats = jnp.dot(sel, stacked, preferred_element_type=jnp.float32) * (1.0 / G)
    g_mean = stats[:, 0:1]                           # (n_groups, 1)
    g_ex2 = stats[:, 1:2]
    # torch std() is unbiased (ddof=1); eps stays on the std (parity with torch).
    g_var = (g_ex2 - g_mean * g_mean) * (G / (G - 1.0))
    g_inv_std = 1.0 / (jnp.sqrt(g_var) + 1e-8)
    packed = jnp.concatenate([g_mean, g_inv_std], axis=-1)            # (n_groups, 2)
    full = jnp.dot(sel_t, packed, preferred_element_type=jnp.float32)  # (tB, 2)
    advantages = (rewards - full[:, 0:1]) * full[:, 1:2]              # (tB, 1)

    # ---- policy softmax statistics (no (tB,V) log-softmax materialized) --------
    p_max = jnp.max(plog, axis=-1, keepdims=True)
    p_shift = plog - p_max
    p_exp = jnp.exp(p_shift)
    p_sum = jnp.sum(p_exp, axis=-1, keepdims=True)
    log_p_sum = jnp.log(p_sum)
    inv_p_sum = 1.0 / p_sum                          # exact: (tB,1), negligible cost

    # ---- reference logsumexp statistics -----------------------------------------
    r_max = jnp.max(ref_logits, axis=-1, keepdims=True)
    r_exp = jnp.exp(ref_logits - r_max)
    log_r_sum = jnp.log(jnp.sum(r_exp, axis=-1, keepdims=True))

    # ---- per-sample KL(policy || reference), algebraically reduced --------------
    # KL_i = (1/p_sum) * sum_v p_exp*(plog - ref) - (p_max - r_max + log p_sum - log r_sum)
    # (exact log-softmax form; deviates from the module's log(q + 1e-8) clamp only
    #  when reference probabilities are ~1e-8 -- documented parity tolerance.)
    cross = jnp.sum(p_exp * (plog - ref_logits), axis=-1, keepdims=True)
    kl = inv_p_sum * cross - (p_max - r_max + log_p_sum - log_r_sum)   # (tB, 1)

    # ---- per-sample partial of the global-mean policy loss ----------------------
    # sum_v log_softmax_iv = sum_v p_shift_iv - V * log p_sum
    logsm_sum = jnp.sum(p_shift, axis=-1, keepdims=True) - V * log_p_sum
    partial = advantages * logsm_sum                                   # (tB, 1)

    # ---- lane-dense packed output: row 0 = KL, row 1 = policy-loss partial ------
    out_ref[...] = jnp.concatenate([kl, partial], axis=-1).T           # (2, tB)


def grpo_loss(embeddings, policy_logits, w_fused, b_fused, *,
              group_size=GROUP_SIZE, kl_coefficient=KL_COEFFICIENT, tile_b=None):
    B, H = embeddings.shape
    Bp, V = policy_logits.shape
    Hw, Vpad = w_fused.shape
    assert B == Bp and Hw == H and Vpad == V + _SCORER_PAD
    assert B % group_size == 0
    # V must be lane-aligned so the reference slice and the scorer block are
    # clean 128-lane tiles (no relayout copies).
    assert V % 128 == 0, "pad the vocab to a multiple of 128"

    # Batch tile: whole groups per tile; 128 keeps the (2, tile_b) output
    # lane-dense and fits v7x's 64 MiB VMEM with headroom at production V while
    # leaving >=2 grid steps for ("parallel",) to occupy both v7x TensorCores.
    if tile_b is None:
        tile_b = min(B, 128)
    assert B % tile_b == 0 and tile_b % group_size == 0
    assert tile_b == B or tile_b % 128 == 0

    # Per-tile group selectors, built once in the wrapper (identical on every
    # grid step; keeps iotas / divides / compares out of the steady-state body).
    n_groups = tile_b // group_size
    gid = jnp.arange(tile_b, dtype=jnp.int32) // group_size
    sel = (gid[None, :] == jnp.arange(n_groups, dtype=jnp.int32)[:, None]
           ).astype(jnp.float32)                     # (n_groups, tile_b)
    sel_t = sel.T                                    # (tile_b, n_groups)

    kernel = functools.partial(_grpo_kernel, group_size=group_size, vocab_size=V)
    out = pl.pallas_call(
        kernel,
        grid=(B // tile_b,),
        out_shape=jax.ShapeDtypeStruct((2, B), jnp.float32),
        in_specs=[
            pl.BlockSpec((tile_b, H), lambda i: (i, 0)),      # streamed, dbl-buffered
            pl.BlockSpec((tile_b, V), lambda i: (i, 0)),      # streamed, dbl-buffered
            pl.BlockSpec((H, V + _SCORER_PAD), lambda i: (0, 0),
                         pipeline_mode=pl.Buffered(1)),       # resident weight, 1 buffer
            pl.BlockSpec((1, V + _SCORER_PAD), lambda i: (0, 0),
                         pipeline_mode=pl.Buffered(1)),       # resident bias, 1 buffer
            pl.BlockSpec((n_groups, tile_b), lambda i: (0, 0)),   # resident selector
            pl.BlockSpec((tile_b, n_groups), lambda i: (0, 0)),   # resident selector^T
        ],
        out_specs=pl.BlockSpec((2, tile_b), lambda i: (0, i)),
        compiler_params=pltpu.CompilerParams(
            dimension_semantics=("parallel",),
            vmem_limit_bytes=64 * 1024 * 1024,
        ),
    )(embeddings, policy_logits, w_fused, b_fused, sel, sel_t)

    kl = out[0]        # (B,)
    partial = out[1]   # (B,)  adv_i * sum_v log_softmax_iv
    # Tiny O(B) epilogue: finish the global mean so the batch grid stays parallel.
    policy_loss = -jnp.sum(partial) / (B * V)
    return policy_loss + kl_coefficient * kl


def _reference_loss(emb, plog, ws, bs, wr, br, group_size, kl_coefficient):
    """Pure-JAX reference mirroring the PyTorch module (eps-clamped logs etc.)."""
    B = emb.shape[0]
    rewards = emb @ ws + bs.reshape(1, 1)
    ref_logits = emb @ wr + br.reshape(1, -1)
    r = rewards.reshape(B // group_size, group_size)
    mean = r.mean(axis=1, keepdims=True)
    std = r.std(axis=1, ddof=1, keepdims=True) + 1e-8
    adv = ((r - mean) / std).reshape(B, 1)
    p = jax.nn.softmax(plog, axis=-1)
    q = jax.nn.softmax(ref_logits, axis=-1)
    kl = jnp.sum(p * (jnp.log(p + 1e-8) - jnp.log(q + 1e-8)), axis=-1)
    policy_loss = -jnp.mean(adv * jax.nn.log_softmax(plog, axis=-1))
    return policy_loss + kl_coefficient * kl


if __name__ == "__main__":
    B, H, V = 8, 32, 128  # batch, hidden, vocab; GROUP_SIZE = 4 -> 2 groups

    key = jax.random.PRNGKey(0)
    k_emb, k_plog, k_ws, k_bs, k_wr, k_br = jax.random.split(key, 6)

    embeddings = jax.random.normal(k_emb, (B, H), dtype=jnp.float32)
    policy_logits = jax.random.normal(k_plog, (B, V), dtype=jnp.float32)

    # deterministic synthetic parameters for the frozen scorer / reference heads
    scorer_w = jax.random.normal(k_ws, (H, 1), dtype=jnp.float32) * 0.1
    scorer_b = jax.random.normal(k_bs, (1,), dtype=jnp.float32) * 0.1
    ref_w = jax.random.normal(k_wr, (H, V), dtype=jnp.float32) * 0.1
    ref_b = jax.random.normal(k_br, (V,), dtype=jnp.float32) * 0.1

    # Heads are frozen -> fuse ONCE at init (not per loss call).  At production
    # scale pass param_dtype=jnp.bfloat16 (and bf16 embeddings / logits).
    w_fused, b_fused = fuse_grpo_heads(scorer_w, scorer_b, ref_w, ref_b)

    loss = grpo_loss(embeddings, policy_logits, w_fused, b_fused)
    loss = jax.block_until_ready(loss)

    ref = _reference_loss(embeddings, policy_logits, scorer_w, scorer_b,
                          ref_w, ref_b, GROUP_SIZE, KL_COEFFICIENT)
    assert loss.shape == (B,)
    # Tolerance covers MXU default-precision matmuls (present in both the kernel
    # and this JAX reference) and the exact log-softmax KL vs. the module's
    # eps-clamped logs (negligible unless reference probabilities are ~1e-8).
    assert jnp.allclose(loss, ref, atol=2e-3, rtol=2e-3), (loss, ref)

    print("KERNEL_OK")
</pallas_src>

<mosaic_0001>
module attributes {stable_mosaic.version = 11 : i64} {
  func.func @_grpo_kernel(%arg0: i32, %arg1: memref<8x32xf32, #tpu.memory_space<vmem>>, %arg2: memref<8x128xf32, #tpu.memory_space<vmem>>, %arg3: memref<32x256xf32, #tpu.memory_space<vmem>>, %arg4: memref<1x256xf32, #tpu.memory_space<vmem>>, %arg5: memref<2x8xf32, #tpu.memory_space<vmem>>, %arg6: memref<8x2xf32, #tpu.memory_space<vmem>>, %arg7: memref<2x8xf32, #tpu.memory_space<vmem>>) attributes {dimension_semantics = [#tpu.dimension_semantics<parallel>], iteration_bounds = array<i64: 1>, scalar_prefetch = 0 : i64, scratch_operands = 0 : i64, tpu.core_type = #tpu.core_type<tc>, window_params = [{transform_indices = @transform_0, window_bounds = array<i64: 8, 32>}, {transform_indices = @transform_1, window_bounds = array<i64: 8, 128>}, {pipeline_mode = #tpu.pipeline_mode<synchronous>, transform_indices = @transform_2, window_bounds = array<i64: 32, 256>}, {pipeline_mode = #tpu.pipeline_mode<synchronous>, transform_indices = @transform_3, window_bounds = array<i64: 1, 256>}, {pipeline_mode = #tpu.pipeline_mode<synchronous>, transform_indices = @transform_4, window_bounds = array<i64: 2, 8>}, {pipeline_mode = #tpu.pipeline_mode<synchronous>, transform_indices = @transform_5, window_bounds = array<i64: 8, 2>}, {transform_indices = @transform_6, window_bounds = array<i64: 2, 8>}]} {
    %c0 = arith.constant 0 : index
    %c0_0 = arith.constant 0 : index
    %0 = vector.load %arg1[%c0, %c0_0] : memref<8x32xf32, #tpu.memory_space<vmem>>, vector<8x32xf32>
    %c0_1 = arith.constant 0 : index
    %c0_2 = arith.constant 0 : index
    %1 = vector.load %arg2[%c0_1, %c0_2] : memref<8x128xf32, #tpu.memory_space<vmem>>, vector<8x128xf32>
    %c0_3 = arith.constant 0 : index
    %c0_4 = arith.constant 0 : index
    %2 = vector.load %arg3[%c0_3, %c0_4] : memref<32x256xf32, #tpu.memory_space<vmem>>, vector<32x256xf32>
    %cst = arith.constant dense<0.000000e+00> : vector<8x256xf32>
    %3 = tpu.matmul %0, %2, %cst {dimension_numbers = #tpu.dot_dimension_numbers<[1], [0], [0], [1], [0, 0, 1, 1], [], []>} : vector<8x32xf32>, vector<32x256xf32>, vector<8x256xf32> -> vector<8x256xf32>
    %c0_5 = arith.constant 0 : index
    %c0_6 = arith.constant 0 : index
    %4 = vector.load %arg4[%c0_5, %c0_6] : memref<1x256xf32, #tpu.memory_space<vmem>>, vector<1x256xf32>
    %5 = vector.broadcast %4 : vector<1x256xf32> to vector<8x256xf32>
    %6 = arith.addf %3, %5 : vector<8x256xf32>
    %7 = vector.extract_strided_slice %6 {offsets = [0, 0], sizes = [8, 128], strides = [1, 1]} : vector<8x256xf32> to vector<8x128xf32>
    %8 = vector.extract_strided_slice %6 {offsets = [0, 128], sizes = [8, 128], strides = [1, 1]} : vector<8x256xf32> to vector<8x128xf32>
    %cst_7 = arith.constant dense<0.000000e+00> : vector<8xf32>
    %9 = vector.multi_reduction <add>, %8, %cst_7 [1] : vector<8x128xf32> to vector<8xf32>
    %10 = vector.shape_cast %9 : vector<8xf32> to vector<8x1xf32>
    %c0_8 = arith.constant 0 : index
    %c0_9 = arith.constant 0 : index
    %11 = vector.load %arg5[%c0_8, %c0_9] : memref<2x8xf32, #tpu.memory_space<vmem>>, vector<2x8xf32>
    %c0_10 = arith.constant 0 : index
    %c0_11 = arith.constant 0 : index
    %12 = vector.load %arg6[%c0_10, %c0_11] : memref<8x2xf32, #tpu.memory_space<vmem>>, vector<8x2xf32>
    %13 = arith.mulf %10, %10 : vector<8x1xf32>
    %14 = tpu.concatenate %10, %13 in 1 : vector<8x1xf32>, vector<8x1xf32> -> vector<8x2xf32>
    %cst_12 = arith.constant dense<0.000000e+00> : vector<2x2xf32>
    %15 = tpu.matmul %11, %14, %cst_12 {dimension_numbers = #tpu.dot_dimension_numbers<[1], [0], [0], [1], [0, 0, 1, 1], [], []>} : vector<2x8xf32>, vector<8x2xf32>, vector<2x2xf32> -> vector<2x2xf32>
    %cst_13 = arith.constant 2.500000e-01 : f32
    %16 = vector.broadcast %cst_13 : f32 to vector<2x2xf32>
    %17 = arith.mulf %15, %16 : vector<2x2xf32>
    %18 = vector.extract_strided_slice %17 {offsets = [0, 0], sizes = [2, 1], strides = [1, 1]} : vector<2x2xf32> to vector<2x1xf32>
    %19 = vector.extract_strided_slice %17 {offsets = [0, 1], sizes = [2, 1], strides = [1, 1]} : vector<2x2xf32> to vector<2x1xf32>
    %20 = arith.mulf %18, %18 : vector<2x1xf32>
    %21 = arith.subf %19, %20 : vector<2x1xf32>
    %cst_14 = arith.constant 1.33333337 : f32
    %22 = vector.broadcast %cst_14 : f32 to vector<2x1xf32>
    %23 = arith.mulf %21, %22 : vector<2x1xf32>
    %24 = math.sqrt %23 : vector<2x1xf32>
    %cst_15 = arith.constant 9.99999993E-9 : f32
    %25 = vector.broadcast %cst_15 : f32 to vector<2x1xf32>
    %26 = arith.addf %24, %25 : vector<2x1xf32>
    %cst_16 = arith.constant 1.000000e+00 : f32
    %27 = vector.broadcast %cst_16 : f32 to vector<2x1xf32>
    %28 = arith.divf %27, %26 : vector<2x1xf32>
    %29 = tpu.concatenate %18, %28 in 1 : vector<2x1xf32>, vector<2x1xf32> -> vector<2x2xf32>
    %cst_17 = arith.constant dense<0.000000e+00> : vector<8x2xf32>
    %30 = tpu.matmul %12, %29, %cst_17 {dimension_numbers = #tpu.dot_dimension_numbers<[1], [0], [0], [1], [0, 0, 1, 1], [], []>} : vector<8x2xf32>, vector<2x2xf32>, vector<8x2xf32> -> vector<8x2xf32>
    %31 = vector.extract_strided_slice %30 {offsets = [0, 0], sizes = [8, 1], strides = [1, 1]} : vector<8x2xf32> to vector<8x1xf32>
    %32 = arith.subf %10, %31 : vector<8x1xf32>
    %33 = vector.extract_strided_slice %30 {offsets = [0, 1], sizes = [8, 1], strides = [1, 1]} : vector<8x2xf32> to vector<8x1xf32>
    %34 = arith.mulf %32, %33 : vector<8x1xf32>
    %cst_18 = arith.constant dense<0xFF800000> : vector<8xf32>
    %35 = vector.multi_reduction <maximumf>, %1, %cst_18 [1] : vector<8x128xf32> to vector<8xf32>
    %36 = vector.shape_cast %35 : vector<8xf32> to vector<8x1xf32>
    %37 = vector.broadcast %36 : vector<8x1xf32> to vector<8x128xf32>
    %38 = arith.subf %1, %37 : vector<8x128xf32>
    %39 = math.exp %38 : vector<8x128xf32>
    %cst_19 = arith.constant dense<0.000000e+00> : vector<8xf32>
    %40 = vector.multi_reduction <add>, %39, %cst_19 [1] : vector<8x128xf32> to vector<8xf32>
    %41 = vector.shape_cast %40 : vector<8xf32> to vector<8x1xf32>
    %42 = math.log %41 : vector<8x1xf32>
    %cst_20 = arith.constant 1.000000e+00 : f32
    %43 = vector.broadcast %cst_20 : f32 to vector<8x1xf32>
    %44 = arith.divf %43, %41 : vector<8x1xf32>
    %cst_21 = arith.constant dense<0xFF800000> : vector<8xf32>
    %45 = vector.multi_reduction <maximumf>, %7, %cst_21 [1] : vector<8x128xf32> to vector<8xf32>
    %46 = vector.shape_cast %45 : vector<8xf32> to vector<8x1xf32>
    %47 = vector.broadcast %46 : vector<8x1xf32> to vector<8x128xf32>
    %48 = arith.subf %7, %47 : vector<8x128xf32>
    %49 = math.exp %48 : vector<8x128xf32>
    %cst_22 = arith.constant dense<0.000000e+00> : vector<8xf32>
    %50 = vector.multi_reduction <add>, %49, %cst_22 [1] : vector<8x128xf32> to vector<8xf32>
    %51 = vector.shape_cast %50 : vector<8xf32> to vector<8x1xf32>
    %52 = math.log %51 : vector<8x1xf32>
    %53 = arith.subf %1, %7 : vector<8x128xf32>
    %54 = arith.mulf %39, %53 : vector<8x128xf32>
    %cst_23 = arith.constant dense<0.000000e+00> : vector<8xf32>
    %55 = vector.multi_reduction <add>, %54, %cst_23 [1] : vector<8x128xf32> to vector<8xf32>
    %56 = vector.shape_cast %55 : vector<8xf32> to vector<8x1xf32>
    %57 = arith.mulf %44, %56 : vector<8x1xf32>
    %58 = arith.subf %36, %46 : vector<8x1xf32>
    %59 = arith.addf %58, %42 : vector<8x1xf32>
    %60 = arith.subf %59, %52 : vector<8x1xf32>
    %61 = arith.subf %57, %60 : vector<8x1xf32>
    %cst_24 = arith.constant dense<0.000000e+00> : vector<8xf32>
    %62 = vector.multi_reduction <add>, %38, %cst_24 [1] : vector<8x128xf32> to vector<8xf32>
    %63 = vector.shape_cast %62 : vector<8xf32> to vector<8x1xf32>
    %cst_25 = arith.constant 1.280000e+02 : f32
    %64 = vector.broadcast %cst_25 : f32 to vector<8x1xf32>
    %65 = arith.mulf %64, %42 : vector<8x1xf32>
    %66 = arith.subf %63, %65 : vector<8x1xf32>
    %67 = arith.mulf %34, %66 : vector<8x1xf32>
    %68 = tpu.concatenate %61, %67 in 1 : vector<8x1xf32>, vector<8x1xf32> -> vector<8x2xf32>
    %69 = tpu.transpose %68, [1, 0] : vector<8x2xf32> -> vector<2x8xf32>
    %c0_26 = arith.constant 0 : index
    %c0_27 = arith.constant 0 : index
    %70 = vector.load %arg7[%c0_26, %c0_27] : memref<2x8xf32, #tpu.memory_space<vmem>>, vector<2x8xf32>
    tpu.vector_store %arg7[%c0_26, %c0_27], %69 {strides = array<i32>} : memref<2x8xf32, #tpu.memory_space<vmem>>, vector<2x8xf32>,
    return
  }
  func.func @transform_0(%arg0: i32) -> (i32, i32) {
    %c0_i32 = arith.constant 0 : i32
    %c0_i32_0 = arith.constant 0 : i32
    return %arg0, %c0_i32 : i32, i32
  }
  func.func @transform_1(%arg0: i32) -> (i32, i32) {
    %c0_i32 = arith.constant 0 : i32
    %c0_i32_0 = arith.constant 0 : i32
    return %arg0, %c0_i32 : i32, i32
  }
  func.func @transform_2(%arg0: i32) -> (i32, i32) {
    %c0_i32 = arith.constant 0 : i32
    %c0_i32_0 = arith.constant 0 : i32
    %c0_i32_1 = arith.constant 0 : i32
    return %c0_i32, %c0_i32_0 : i32, i32
  }
  func.func @transform_3(%arg0: i32) -> (i32, i32) {
    %c0_i32 = arith.constant 0 : i32
    %c0_i32_0 = arith.constant 0 : i32
    %c0_i32_1 = arith.constant 0 : i32
    return %c0_i32, %c0_i32_0 : i32, i32
  }
  func.func @transform_4(%arg0: i32) -> (i32, i32) {
    %c0_i32 = arith.constant 0 : i32
    %c0_i32_0 = arith.constant 0 : i32
    %c0_i32_1 = arith.constant 0 : i32
    return %c0_i32, %c0_i32_0 : i32, i32
  }
  func.func @transform_5(%arg0: i32) -> (i32, i32) {
    %c0_i32 = arith.constant 0 : i32
    %c0_i32_0 = arith.constant 0 : i32
    %c0_i32_1 = arith.constant 0 : i32
    return %c0_i32, %c0_i32_0 : i32, i32
  }
  func.func @transform_6(%arg0: i32) -> (i32, i32) {
    %c0_i32 = arith.constant 0 : i32
    %c0_i32_0 = arith.constant 0 : i32
    return %c0_i32, %arg0 : i32, i32
  }
}

</mosaic_0001>

<llo_original>
// kernel: tpu_custom_call.1
$region0: #{tpu_custom_call.1}
  #allocation0 [shape = 'u32[]', space=smem, size = 0x4, offset = 0x4, fixed_abs, tag = 'smem constant byte address 0x4 - core index']
  #allocation1 [shape = 'u32[144,128]{1,0:T(1,128)}', space=vmem, size = 0x12000, scoped, tag = 'internal scratch']
  %s0 = inlined_call_operand.vmem [shape: f32[8,32], index: 0, kind: input, shape index: {}]
  %s1 = inlined_call_operand.hbm [shape: f32[8,128], index: 1, kind: input, shape index: {}]
  %s2 = inlined_call_operand.hbm [shape: f32[32,256], index: 2, kind: input, shape index: {}]
  %s3 = inlined_call_operand.vmem [shape: f32[1,256], index: 3, kind: input, shape index: {}]
  %s4 = inlined_call_operand.vmem [shape: f32[2,8], index: 4, kind: input, shape index: {}]
  %s5 = inlined_call_operand.vmem [shape: f32[8,2], index: 5, kind: input, shape index: {}]
  %s6 = inlined_call_operand.hbm [shape: f32[2,8], index: 6, kind: output, shape index: {}]
  %s7 = sld [smem:[#allocation0]]
  $region42: #{tpu_custom_call.1} parent=0
    _
  %s9 = ssub.s32 1, %s7
  %s10 = scalar_select 0, %s9, %s7
  $region1: #{tpu_custom_call.1} parent=0
    #allocation2 [shape = 'u8[4096]{0}', space=vmem, size = 0x1000, scoped, tag = 'input window, operand 1, single buffered']
    #allocation3 [shape = 's32[1]{0}', space=sflag, size = 0x4, scoped, tag = 'scoped memory for tpu_custom_call.1']
    #allocation4 [shape = 's32[1]{0}', space=sflag, size = 0x4, scoped, tag = 'scoped memory for tpu_custom_call.1']
    #allocation5 [shape = 'u8[32768]{0}', space=vmem, size = 0x8000, scoped, tag = 'input window, operand 2, single buffered']
    #allocation6 [shape = 's32[1]{0}', space=sflag, size = 0x4, scoped, tag = 'scoped memory for tpu_custom_call.1']
    #allocation7 [shape = 'u8[1024]{0}', space=vmem, size = 0x400, scoped, tag = 'output window, operand 0, single buffered']
    %11 = vsyncpa [#allocation3], 0
    %12 = vsyncpa [#allocation6], 0
    %13 = vsyncpa [#allocation4], 0
    // Predicated region
    $region2: #{tpu_custom_call.1} parent=1 // pred_check
      _
    $region3: #{tpu_custom_call.1} parent=1 // pred_check_branch
      %15 = sbr.rel (0) target = $region5
    $region4: #{tpu_custom_call.1} parent=1 // pred_region
      _
    $region5: #{tpu_custom_call.1} parent=1 // pred_fallthru
      _
    // Predicated region
    $region6: #{tpu_custom_call.1} parent=1 // pred_check
      _
    $region7: #{tpu_custom_call.1} parent=1 // pred_check_branch
      %17 = sbr.rel (0) target = $region9
    $region8: #{tpu_custom_call.1} parent=1 // pred_region
      %s19 = ssub.s32 128, 128
      %20 = vsyncadd [#allocation3], %s19
      %s22 = sshll.u32 [#allocation2], 4
      %s23 = int_to_ptr.vmem [resolvable:$true] %s22
      %25 = dma.hbm_to_vmem [thread:$0]  %s1, 128, %s23, [#allocation3]
    $region9: #{tpu_custom_call.1} parent=1 // pred_fallthru
      _
    // Predicated region
    $region10: #{tpu_custom_call.1} parent=1 // pred_check
      _
    $region11: #{tpu_custom_call.1} parent=1 // pred_check_branch
      %27 = sbr.rel (0) target = $region13
    $region12: #{tpu_custom_call.1} parent=1 // pred_region
      %s29 = ssub.s32 1024, 1024
      %30 = vsyncadd [#allocation6], %s29
      %s31 = sshll.u32 [#allocation5], 4
      %s32 = int_to_ptr.vmem [resolvable:$true] %s31
      %37 = dma.hbm_to_vmem [thread:$0]  %s2, 1024, %s32, [#allocation6], 256, 256, 16
    $region13: #{tpu_custom_call.1} parent=1 // pred_fallthru
      _
    // Predicated region
    $region14: #{tpu_custom_call.1} parent=1 // pred_check
      _
    $region15: #{tpu_custom_call.1} parent=1 // pred_check_branch
      %39 = sbr.rel (0) target = $region17
    $region16: #{tpu_custom_call.1} parent=1 // pred_region
      _
    $region17: #{tpu_custom_call.1} parent=1 // pred_fallthru
      _
    // Predicated region
    $region18: #{tpu_custom_call.1} parent=1 // pred_check
      _
    $region19: #{tpu_custom_call.1} parent=1 // pred_check_branch
      %41 = sbr.rel (0) target = $region21
    $region20: #{tpu_custom_call.1} parent=1 // pred_region
      _
    $region21: #{tpu_custom_call.1} parent=1 // pred_fallthru
      _
    // Predicated region
    $region22: #{tpu_custom_call.1} parent=1 // pred_check
      _
    $region23: #{tpu_custom_call.1} parent=1 // pred_check_branch
      %43 = sbr.rel (0) target = $region25
    $region24: #{tpu_custom_call.1} parent=1 // pred_region
      _
    $region25: #{tpu_custom_call.1} parent=1 // pred_fallthru
      _
    // Predicated region
    $region26: #{tpu_custom_call.1} parent=1 // pred_check
      _
    $region27: #{tpu_custom_call.1} parent=1 // pred_check_branch
      %45 = sbr.rel (0) target = $region29
    $region28: #{tpu_custom_call.1} parent=1 // pred_region
      %46 = dma.done [#allocation3], 128
    $region29: #{tpu_custom_call.1} parent=1 // pred_fallthru
      _
    // Predicated region
    $region30: #{tpu_custom_call.1} parent=1 // pred_check
      _
    $region31: #{tpu_custom_call.1} parent=1 // pred_check_branch
      %48 = sbr.rel (0) target = $region33
    $region32: #{tpu_custom_call.1} parent=1 // pred_region
      %49 = dma.done [#allocation6], 1024
    $region33: #{tpu_custom_call.1} parent=1 // pred_fallthru
      _
    %v50 = vld [vmem:[%s0] sm:$0xff]
    %v51 = vld [vmem:[#allocation2] sm:$0xff]
    %v52 = vld [vmem:[#allocation5] sm:$0xff]
    %v53 = vld [vmem:[#allocation5 + $0x8] sm:$0xff]
    %v54 = vld [vmem:[#allocation5 + $0x10] sm:$0xff]
    %v55 = vld [vmem:[#allocation5 + $0x18] sm:$0xff]
    %v56 = vld [vmem:[#allocation5 + $0x20] sm:$0xff]
    %v57 = vld [vmem:[#allocation5 + $0x28] sm:$0xff]
    %v58 = vld [vmem:[#allocation5 + $0x30] sm:$0xff]
    %v59 = vld [vmem:[#allocation5 + $0x38] sm:$0xff]
    %v60 = vld [vmem:[%s3] sm:$0x3]
    %v62 = vlaneseq
    %v63 = vshrl.u32 %v62, 7
    %v64 = vsub.s32 0, %v63
    %v65 = vrot.slane %v60, %v64
    %v66 = vlaneseq
    %v67 = vshrl.u32 %v66, 7
    %v68 = vsub.s32 1, %v67
    %v69 = vrot.slane %v60, %v68
    %vm72 = vcmask 261120
    %v74 = vsel %vm72, %v50, 0
    %76 = vmatprep.subr.mxu0 0.0
    %77 = vmatpush1.msra.mxu0 0.0
    %78 = vmatprep.subr.mxu0 0.0
    %79 = vmatpush1.msra.mxu0 0.0
    %80 = vmatprep.subr.mxu0 0.0
    %81 = vmatpush1.msra.mxu0 0.0
    %82 = vmatprep.subr.mxu0 0.0
    %83 = vmatpush1.msra.mxu0 0.0
    %84 = vmatprep.subr.mxu0 0.0
    %85 = vmatpush1.msra.mxu0 0.0
    %86 = vmatprep.subr.mxu0 0.0
    %87 = vmatpush1.msra.mxu0 0.0
    %88 = vmatprep.subr.mxu0 0.0
    %89 = vmatpush1.msra.mxu0 0.0
    %90 = vmatprep.subr.mxu0 0.0
    %91 = vmatpush1.msra.mxu0 0.0
    %92 = vmatprep.subr.mxu0 0.0
    %93 = vmatpush1.msra.mxu0 0.0
    %94 = vmatprep.subr.mxu0 0.0
    %95 = vmatpush1.msra.mxu0 0.0
    %96 = vmatprep.subr.mxu0 0.0
    %97 = vmatpush1.msra.mxu0 0.0
    %98 = vmatprep.subr.mxu0 0.0
    %99 = vmatpush1.msra.mxu0 0.0
    %100 = vmatprep.subr.mxu0 %v59
    %101 = vmatpush1.msra.mxu0 %v58
    %102 = vmatprep.subr.mxu0 %v57
    %103 = vmatpush1.msra.mxu0 %v56
    %104 = vmatprep.subr.mxu0 %v55
    %105 = vmatpush1.msra.mxu0 %v54
    %106 = vmatprep.subr.mxu0 %v53
    %107 = vmatpush1.msra.mxu0 %v52
    %108 = vmatprep.subr.mxu0 0.0
    %109 = vmatpush2.msra.mxu0 0.0
    %110 = vmatprep.subr.mxu0 0.0
    %111 = vmatpush2.msra.mxu0 0.0
    %112 = vmatprep.subr.mxu0 0.0
    %113 = vmatpush2.msra.mxu0 0.0
    %114 = vmatprep.subr.mxu0 0.0
    %115 = vmatpush2.msra.mxu0 0.0
    %116 = vmatprep.subr.mxu0 0.0
    %117 = vmatpush2.msra.mxu0 0.0
    %118 = vmatprep.subr.mxu0 0.0
    %119 = vmatpush2.msra.mxu0 0.0
    %120 = vmatprep.subr.mxu0 0.0
    %121 = vmatpush2.msra.mxu0 0.0
    %122 = vmatprep.subr.mxu0 0.0
    %123 = vmatpush2.msra.mxu0 0.0
    %124 = vmatprep.subr.mxu0 0.0
    %125 = vmatpush2.msra.mxu0 0.0
    %126 = vmatprep.subr.mxu0 0.0
    %127 = vmatpush2.msra.mxu0 0.0
    %128 = vmatprep.subr.mxu0 0.0
    %129 = vmatpush2.msra.mxu0 0.0
    %130 = vmatprep.subr.mxu0 0.0
    %131 = vmatpush2.msra.mxu0 0.0
    %132 = vmatprep.subr.mxu0 0.0
    %133 = vmatpush2.msra.mxu0 0.0
    %134 = vmatprep.subr.mxu0 0.0
    %135 = vmatpush2.msra.mxu0 0.0
    %136 = vmatprep.subr.mxu0 0.0
    %137 = vmatpush2.msra.mxu0 0.0
    %138 = vmatprep.subr.mxu0 0.0
    %139 = vmatpush2.msra.mxu0 0.0
    %140 = vmatprep.mubr.f32.mxu0 0.0
    %141 = vmatmul.mubr.f32.gmra.mxu0 %v74
    %v142 = vpop.f32.mrf.mxu0
    %v143 = vadd.f32 %v65, %v142
    %v144 = vpop.f32.mrf.mxu0
    %v145 = vadd.f32 %v69, %v144
    %146 = vdwg.mxu0
    %147 = vadd.xlane.f32.xlu0 %v145
    %v148 = vpop.xlane.xlu0 %147
    %v149 = vld [vmem:[%s4] sm:$0x3]
    %v150 = vld [vmem:[%s5] sm:$0xff]
    %v151 = vmul.f32 %v148, %v148
    %vm152 = vcmask 7168
    %v153 = vsel %vm152, %v148, %v151
    %vm154 = vcmask 64512
    %v156 = vsel %vm154, %v149, 0
    %158 = vmatprep.subr.mxu0 0.0
    %159 = vmatpush1.msra.mxu0 0.0
    %160 = vmatprep.subr.mxu0 0.0
    %161 = vmatpush1.msra.mxu0 0.0
    %162 = vmatprep.subr.mxu0 0.0
    %163 = vmatpush1.msra.mxu0 0.0
    %164 = vmatprep.subr.mxu0 0.0
    %165 = vmatpush1.msra.mxu0 0.0
    %166 = vmatprep.subr.mxu0 0.0
    %167 = vmatpush1.msra.mxu0 0.0
    %168 = vmatprep.subr.mxu0 0.0
    %169 = vmatpush1.msra.mxu0 0.0
    %170 = vmatprep.subr.mxu0 0.0
    %171 = vmatpush1.msra.mxu0 0.0
    %172 = vmatprep.subr.mxu0 0.0
    %173 = vmatpush1.msra.mxu0 0.0
    %174 = vmatprep.subr.mxu0 0.0
    %175 = vmatpush1.msra.mxu0 0.0
    %176 = vmatprep.subr.mxu0 0.0
    %177 = vmatpush1.msra.mxu0 0.0
    %178 = vmatprep.subr.mxu0 0.0
    %179 = vmatpush1.msra.mxu0 0.0
    %180 = vmatprep.subr.mxu0 0.0
    %181 = vmatpush1.msra.mxu0 0.0
    %182 = vmatprep.subr.mxu0 0.0
    %183 = vmatpush1.msra.mxu0 0.0
    %184 = vmatprep.subr.mxu0 0.0
    %185 = vmatpush1.msra.mxu0 0.0
    %186 = vmatprep.subr.mxu0 0.0
    %187 = vmatpush1.msra.mxu0 0.0
    %188 = vmatprep.subr.mxu0 0.0
    %189 = vmatpush1.msra.mxu0 %v153
    %190 = vmatprep.subr.mxu0 0.0
    %191 = vmatpush2.msra.mxu0 0.0
    %192 = vmatprep.subr.mxu0 0.0
    %193 = vmatpush2.msra.mxu0 0.0
    %194 = vmatprep.subr.mxu0 0.0
    %195 = vmatpush2.msra.mxu0 0.0
    %196 = vmatprep.subr.mxu0 0.0
    %197 = vmatpush2.msra.mxu0 0.0
    %198 = vmatprep.subr.mxu0 0.0
    %199 = vmatpush2.msra.mxu0 0.0
    %200 = vmatprep.subr.mxu0 0.0
    %201 = vmatpush2.msra.mxu0 0.0
    %202 = vmatprep.subr.mxu0 0.0
    %203 = vmatpush2.msra.mxu0 0.0
    %204 = vmatprep.subr.mxu0 0.0
    %205 = vmatpush2.msra.mxu0 0.0
    %206 = vmatprep.subr.mxu0 0.0
    %207 = vmatpush2.msra.mxu0 0.0
    %208 = vmatprep.subr.mxu0 0.0
    %209 = vmatpush2.msra.mxu0 0.0
    %210 = vmatprep.subr.mxu0 0.0
    %211 = vmatpush2.msra.mxu0 0.0
    %212 = vmatprep.subr.mxu0 0.0
    %213 = vmatpush2.msra.mxu0 0.0
    %214 = vmatprep.subr.mxu0 0.0
    %215 = vmatpush2.msra.mxu0 0.0
    %216 = vmatprep.subr.mxu0 0.0
    %217 = vmatpush2.msra.mxu0 0.0
    %218 = vmatprep.subr.mxu0 0.0
    %219 = vmatpush2.msra.mxu0 0.0
    %220 = vmatprep.subr.mxu0 0.0
    %221 = vmatpush2.msra.mxu0 0.0
    %222 = vmatprep.mubr.f32.mxu0 0.0
    %223 = vmatmul.mubr.f32.gmra.mxu0 %v156
    %v224 = vpop.f32.mrf.mxu0
    %v225 = vadd.f32 0.0, %v224
    %v226 = vpop.f32.mrf.mxu0
    %227 = vdwg.mxu0
    %v228 = vmul.f32 %v225, 0.25
    %v229 = vmul.f32 %v228, %v228
    %231 = vrot.lane.b32.xlu0 %v229, 1
    %v232 = vpop.permute.xlu0 %231
    %v234 = vsub.f32 %v228, %v232
    %v235 = vmul.f32 %v234, 1.3333334
    %v236 = vrsqrt.pop %v235
    %v237 = vmul.f32 %v235, %v236
    %vm238 = vcmp.eq.f32.partialorder %v235, inf
    %v239 = vsel %vm238, %v235, %v237
    %vm240 = vcmp.eq.f32.partialorder %v235, 0.0
    %v241 = vand.u32 %v235, 2147483648
    %v242 = vsel %vm240, %v241, %v239
    %v243 = vadd.f32 %v242, 1e-08
    %v244 = vrcp.pop %v243
    %v245 = vmul.f32 1.0, %v244
    %v246 = vsel %vm152, %v228, %v245
    %vm247 = vcmask 15360
    %v249 = vsel %vm247, %v150, 0
    %vm251 = vcmask 1041408
    %v253 = vsel %vm251, %v246, 0
    %255 = vmatprep.subr.mxu0 0.0
    %256 = vmatpush1.msra.mxu0 0.0
    %257 = vmatprep.subr.mxu0 0.0
    %258 = vmatpush1.msra.mxu0 0.0
    %259 = vmatprep.subr.mxu0 0.0
    %260 = vmatpush1.msra.mxu0 0.0
    %261 = vmatprep.subr.mxu0 0.0
    %262 = vmatpush1.msra.mxu0 0.0
    %263 = vmatprep.subr.mxu0 0.0
    %264 = vmatpush1.msra.mxu0 0.0
    %265 = vmatprep.subr.mxu0 0.0
    %266 = vmatpush1.msra.mxu0 0.0
    %267 = vmatprep.subr.mxu0 0.0
    %268 = vmatpush1.msra.mxu0 0.0
    %269 = vmatprep.subr.mxu0 0.0
    %270 = vmatpush1.msra.mxu0 0.0
    %271 = vmatprep.subr.mxu0 0.0
    %272 = vmatpush1.msra.mxu0 0.0
    %273 = vmatprep.subr.mxu0 0.0
    %274 = vmatpush1.msra.mxu0 0.0
    %275 = vmatprep.subr.mxu0 0.0
    %276 = vmatpush1.msra.mxu0 0.0
    %277 = vmatprep.subr.mxu0 0.0
    %278 = vmatpush1.msra.mxu0 0.0
    %279 = vmatprep.subr.mxu0 0.0
    %280 = vmatpush1.msra.mxu0 0.0
    %281 = vmatprep.subr.mxu0 0.0
    %282 = vmatpush1.msra.mxu0 0.0
    %283 = vmatprep.subr.mxu0 0.0
    %284 = vmatpush1.msra.mxu0 0.0
    %285 = vmatprep.subr.mxu0 0.0
    %286 = vmatpush1.msra.mxu0 %v253
    %287 = vmatprep.subr.mxu0 0.0
    %288 = vmatpush2.msra.mxu0 0.0
    %289 = vmatprep.subr.mxu0 0.0
    %290 = vmatpush2.msra.mxu0 0.0
    %291 = vmatprep.subr.mxu0 0.0
    %292 = vmatpush2.msra.mxu0 0.0
    %293 = vmatprep.subr.mxu0 0.0
    %294 = vmatpush2.msra.mxu0 0.0
    %295 = vmatprep.subr.mxu0 0.0
    %296 = vmatpush2.msra.mxu0 0.0
    %297 = vmatprep.subr.mxu0 0.0
    %298 = vmatpush2.msra.mxu0 0.0
    %299 = vmatprep.subr.mxu0 0.0
    %300 = vmatpush2.msra.mxu0 0.0
    %301 = vmatprep.subr.mxu0 0.0
    %302 = vmatpush2.msra.mxu0 0.0
    %303 = vmatprep.subr.mxu0 0.0
    %304 = vmatpush2.msra.mxu0 0.0
    %305 = vmatprep.subr.mxu0 0.0
    %306 = vmatpush2.msra.mxu0 0.0
    %307 = vmatprep.subr.mxu0 0.0
    %308 = vmatpush2.msra.mxu0 0.0
    %309 = vmatprep.subr.mxu0 0.0
    %310 = vmatpush2.msra.mxu0 0.0
    %311 = vmatprep.subr.mxu0 0.0
    %312 = vmatpush2.msra.mxu0 0.0
    %313 = vmatprep.subr.mxu0 0.0
    %314 = vmatpush2.msra.mxu0 0.0
    %315 = vmatprep.subr.mxu0 0.0
    %316 = vmatpush2.msra.mxu0 0.0
    %317 = vmatprep.subr.mxu0 0.0
    %318 = vmatpush2.msra.mxu0 0.0
    %319 = vmatprep.mubr.f32.mxu0 0.0
    %320 = vmatmul.mubr.f32.gmra.mxu0 %v249
    %v321 = vpop.f32.mrf.mxu0
    %v322 = vadd.f32 0.0, %v321
    %v323 = vpop.f32.mrf.mxu0
    %324 = vdwg.mxu0
    %v325 = vsub.f32 %v148, %v322
    %327 = vrot.lane.b32.xlu0 %v322, 127
    %v328 = vpop.permute.xlu0 %327
    %v330 = vmul.f32 %v325, %v328
    %331 = vmax.xlane.f32.xlu0 %v51
    %v332 = vpop.xlane.xlu0 %331
    %v333 = vsub.f32 %v51, %v332
    %v334 = vmul.f32 %v333, 1.442695
    %v335 = vpow.pop %v334
    %336 = vadd.xlane.f32.xlu0 %v335
    %v337 = vpop.xlane.xlu0 %336
    %v338 = vlog2.pop %v337
    %v339 = vmul.f32 %v338, 0.6931472
    %v340 = vrcp.pop %v337
    %v341 = vmul.f32 1.0, %v340
    %342 = vmax.xlane.f32.xlu0 %v143
    %v343 = vpop.xlane.xlu0 %342
    %v344 = vsub.f32 %v143, %v343
    %v345 = vmul.f32 %v344, 1.442695
    %v346 = vpow.pop %v345
    %347 = vadd.xlane.f32.xlu0 %v346
    %v348 = vpop.xlane.xlu0 %347
    %v349 = vlog2.pop %v348
    %v350 = vmul.f32 %v349, 0.6931472
    %v351 = vsub.f32 %v51, %v143
    %v352 = vmul.f32 %v335, %v351
    %353 = vadd.xlane.f32.xlu0 %v352
    %v354 = vpop.xlane.xlu0 %353
    %v355 = vmul.f32 %v341, %v354
    %v356 = vsub.f32 %v332, %v343
    %v357 = vadd.f32 %v356, %v339
    %v358 = vsub.f32 %v357, %v350
    %v359 = vsub.f32 %v355, %v358
    %360 = vadd.xlane.f32.xlu0 %v333
    %v361 = vpop.xlane.xlu0 %360
    %v362 = vmul.f32 %v339, 128.0
    %v363 = vsub.f32 %v361, %v362
    %v364 = vmul.f32 %v330, %v363
    %366 = vrot.lane.b32.xlu0 %v364, 1
    %v367 = vpop.permute.xlu0 %366
    %v369 = vsel %vm152, %v359, %v367
    %370 = vxpose.xlu0.b32.start [1/16] %v369, 128
    %371 = vxpose.xlu0.b32.cont [2/16] 0.0, 128
    %372 = vxpose.xlu0.b32.cont [3/16] 0.0, 128
    %373 = vxpose.xlu0.b32.cont [4/16] 0.0, 128
    %374 = vxpose.xlu0.b32.cont [5/16] 0.0, 128
    %375 = vxpose.xlu0.b32.cont [6/16] 0.0, 128
    %376 = vxpose.xlu0.b32.cont [7/16] 0.0, 128
    %377 = vxpose.xlu0.b32.cont [8/16] 0.0, 128
    %378 = vxpose.xlu0.b32.cont [9/16] 0.0, 128
    %379 = vxpose.xlu0.b32.cont [10/16] 0.0, 128
    %380 = vxpose.xlu0.b32.cont [11/16] 0.0, 128
    %381 = vxpose.xlu0.b32.cont [12/16] 0.0, 128
    %382 = vxpose.xlu0.b32.cont [13/16] 0.0, 128
    %383 = vxpose.xlu0.b32.cont [14/16] 0.0, 128
    %384 = vxpose.xlu0.b32.cont [15/16] 0.0, 128
    %385 = vxpose.xlu0.b32.end [16/16] 0.0, 128
    %v386 = vpop.trf.xlu0
    %v387 = vpop.trf.xlu0
    %v388 = vpop.trf.xlu0
    %v389 = vpop.trf.xlu0
    %v390 = vpop.trf.xlu0
    %v391 = vpop.trf.xlu0
    %v392 = vpop.trf.xlu0
    %v393 = vpop.trf.xlu0
    %v394 = vpop.trf.xlu0
    %v395 = vpop.trf.xlu0
    %v396 = vpop.trf.xlu0
    %v397 = vpop.trf.xlu0
    %v398 = vpop.trf.xlu0
    %v399 = vpop.trf.xlu0
    %v400 = vpop.trf.xlu0
    %v401 = vpop.trf.xlu0
    %vm402 = vcmask 58368
    %403 = vst.msk [vmem:[#allocation7] sm:$0x3] %vm402, %v386
    // Predicated region
    $region34: #{tpu_custom_call.1} parent=1 // pred_check
      _
    $region35: #{tpu_custom_call.1} parent=1 // pred_check_branch
      %405 = sbr.rel (0) target = $region37
    $region36: #{tpu_custom_call.1} parent=1 // pred_region
      %s407 = ssub.s32 32, 32
      %408 = vsyncadd [#allocation4], %s407
      %s410 = sshll.u32 [#allocation7], 4
      %s411 = int_to_ptr.vmem [resolvable:$true] %s410
      %413 = dma.vmem_to_hbm [thread:$0]  %s411, 32, %s6, [#allocation4]
    $region37: #{tpu_custom_call.1} parent=1 // pred_fallthru
      _
    // Predicated region
    $region38: #{tpu_custom_call.1} parent=1 // pred_check
      _
    $region39: #{tpu_custom_call.1} parent=1 // pred_check_branch
      %415 = sbr.rel (0) target = $region41
    $region40: #{tpu_custom_call.1} parent=1 // pred_region
      %416 = dma.done [#allocation4], 32
    $region41: #{tpu_custom_call.1} parent=1 // pred_fallthru
      _
    %417 = vsyncpa [#allocation3], 1
    %418 = vsyncpa [#allocation6], 1
    %419 = vsyncpa [#allocation4], 1

</llo_original>
